<compile_context>
chip_gen: v6e
topology: v6e:2x2x1
jax: 0.10.0
libtpu: 0.0.40
codegen_flags: <defaults>
</compile_context>

<pallas_src>
import numpy as np
import jax
import jax.numpy as jnp
from jax import lax
from jax.experimental import pallas as pl
from jax.experimental.pallas import tpu as pltpu


def _make_kernel(add_bias):
    """Build kernel body; with add_bias=False the SMEM bias operand is elided."""

    def body(zrow_ref, zcol_ref, wt_ref, blin_ref, o_ref, h_ref, bias_ref=None):
        # zrow_ref: (1, TM, Dp)   zcol_ref: (1, TN, Dp)
        # wt_ref:   (Dp, Dp)  (already W^T / scale)
        # blin_ref: (1, Dp)   (already b_lin / scale, f32)
        # o_ref:    (1, TM, TN)   h_ref: (TM, Dp) scratch in compute dtype
        j = pl.program_id(2)

        @pl.when(j == 0)
        def _():
            # h = z_row @ (W^T/scale) + b_lin/scale -- once per row tile,
            # cast to the compute dtype once (no per-column-step re-cast).
            h32 = jnp.dot(zrow_ref[0], wt_ref[...],
                          preferred_element_type=jnp.float32)
            h32 = h32 + blin_ref[...].astype(jnp.float32)
            h_ref[...] = h32.astype(h_ref.dtype)

        # s = h @ z_col^T (+ bias): contract last dims of both operands
        # (NT layout, no in-kernel transpose).
        s = lax.dot_general(
            h_ref[...], zcol_ref[0],
            dimension_numbers=(((1,), (1,)), ((), ())),
            preferred_element_type=jnp.float32,
        )
        if add_bias:
            s = s + bias_ref[0]
        o_ref[0] = s.astype(o_ref.dtype)

    if add_bias:
        def kernel(bias_ref, zrow_ref, zcol_ref, wt_ref, blin_ref, o_ref, h_ref):
            body(zrow_ref, zcol_ref, wt_ref, blin_ref, o_ref, h_ref, bias_ref)
    else:
        def kernel(zrow_ref, zcol_ref, wt_ref, blin_ref, o_ref, h_ref):
            body(zrow_ref, zcol_ref, wt_ref, blin_ref, o_ref, h_ref)
    return kernel


def bilinear_contact_map(z, w, b_lin, bias, hidden_dim=1000, tm=None, tn=None):
    """z: (B, L, D); w: (D, D); b_lin: (D,); bias: scalar. Returns (B, L, L) in z.dtype."""
    B, L, D = z.shape
    scale = float(np.sqrt(hidden_dim))
    dtype = z.dtype
    itemsize = jnp.dtype(dtype).itemsize

    # Host-side prep (once): pre-transpose W and fold 1/scale into W and b_lin.
    w_t = (jnp.asarray(w).T / scale).astype(dtype)                  # (D, D)
    b_lin2d = (jnp.asarray(b_lin, jnp.float32) / scale).reshape(1, D)

    # Zero-pad the embedding dim to a multiple of 128: lane-dense MXU feeds,
    # padded features contribute exactly 0 to both contractions.
    Dp = D if D % 128 == 0 else ((D + 127) // 128) * 128
    if Dp != D:
        z = jnp.pad(z, ((0, 0), (0, 0), (0, Dp - D)))
        w_t = jnp.pad(w_t, ((0, Dp - D), (0, Dp - D)))
        b_lin2d = jnp.pad(b_lin2d, ((0, 0), (0, Dp - D)))

    # Statically-zero bias (module init) -> drop SMEM operand + per-tile add.
    add_bias = True
    if not isinstance(bias, jax.core.Tracer):
        add_bias = bool(np.any(np.asarray(jax.device_get(jnp.asarray(bias))) != 0.0))
    bias1d = jnp.asarray(bias, jnp.float32).reshape(1)

    # Per-generation VMEM budget (v5e/v6e: 128 MiB, v7x: 64 MiB) with headroom.
    try:
        vmem_capacity = int(getattr(pltpu.get_tpu_info(), "vmem_capacity_bytes",
                                    64 << 20))
    except Exception:
        vmem_capacity = 64 << 20
    budget = int(0.8 * vmem_capacity)

    # Tile selection: big tiles beat the ~0.35us/step overhead; collapse the
    # column axis when the whole key block is only a few MiB.
    if tn is None:
        tn = L if L * Dp * itemsize <= (4 << 20) else min(L, 1024)
    if tm is None:
        tm = min(L, 512)
    # v7x megacore: ensure the two "parallel" axes expose >= 2 work units.
    if B * pl.cdiv(L, tm) < 2 and L > 128:
        tm = max(128, ((pl.cdiv(L, 2) + 127) // 128) * 128)

    def vmem_est(tm_, tn_):
        return (2 * (tm_ + tn_) * Dp * itemsize      # double-buffered z tiles
                + Dp * Dp * itemsize + Dp * 4        # W^T / b_lin (single-buffered)
                + 2 * tm_ * tn_ * itemsize           # double-buffered output tiles
                + tm_ * Dp * itemsize)               # h scratch
    while vmem_est(tm, tn) > budget and (tm > 128 or tn > 128):
        if tn >= tm and tn > 128:
            tn = max(128, tn // 2)
        else:
            tm = max(128, tm // 2)

    n_m, n_n = pl.cdiv(L, tm), pl.cdiv(L, tn)
    vmem_limit = int(min(max(2 * vmem_est(tm, tn), 32 << 20), budget))

    grid_invariant = dict(pipeline_mode=pl.Buffered(1))  # no wasted 2nd buffer
    in_specs = [
        pl.BlockSpec((1, tm, Dp), lambda b, i, j: (b, i, 0)),   # z row tile
        pl.BlockSpec((1, tn, Dp), lambda b, i, j: (b, j, 0)),   # z col tile
        pl.BlockSpec((Dp, Dp), lambda b, i, j: (0, 0), **grid_invariant),
        pl.BlockSpec((1, Dp), lambda b, i, j: (0, 0), **grid_invariant),
    ]
    args = (z, z, w_t, b_lin2d)
    if add_bias:
        in_specs = [pl.BlockSpec(memory_space=pltpu.SMEM)] + in_specs
        args = (bias1d,) + args

    cost = pl.CostEstimate(
        flops=int(2 * B * L * Dp * (L + Dp)),
        transcendentals=0,
        bytes_accessed=int(B * L * Dp * itemsize * (1 + n_m)
                           + B * L * L * itemsize + Dp * Dp * itemsize),
    )

    return pl.pallas_call(
        _make_kernel(add_bias),
        out_shape=jax.ShapeDtypeStruct((B, L, L), dtype),
        grid_spec=pltpu.PrefetchScalarGridSpec(
            num_scalar_prefetch=0,
            grid=(B, n_m, n_n),
            in_specs=in_specs,
            out_specs=pl.BlockSpec((1, tm, tn), lambda b, i, j: (b, i, j)),
            scratch_shapes=[pltpu.VMEM((tm, Dp), dtype)],
        ),
        compiler_params=pltpu.CompilerParams(
            dimension_semantics=("parallel", "parallel", "arbitrary"),
            vmem_limit_bytes=vmem_limit,
        ),
        cost_estimate=cost,
    )(*args)


def reference(z, w, b_lin, bias, hidden_dim=1000):
    scale = np.sqrt(hidden_dim)
    h = jnp.einsum("bld,ed->ble", z, w) + b_lin   # nn.Linear: z @ W^T + b
    s = jnp.einsum("ble,bme->blm", h, z) / scale + bias
    return s


if __name__ == "__main__":
    # Small shapes consistent with the module: batch=2, seq=8, embed_dim=32.
    B, L, D = 2, 8, 32
    key = jax.random.PRNGKey(0)
    kz, kw, kb = jax.random.split(key, 3)

    z = jax.random.normal(kz, (B, L, D), dtype=jnp.float32)
    bound = 1.0 / np.sqrt(D)
    w = jax.random.uniform(kw, (D, D), minval=-bound, maxval=bound, dtype=jnp.float32)
    b_lin = jax.random.uniform(kb, (D,), minval=-bound, maxval=bound, dtype=jnp.float32)

    # Module initializes bias to 0 -> exercises the bias-elided fast path.
    bias0 = jnp.zeros((), jnp.float32)
    out0 = jax.block_until_ready(bilinear_contact_map(z, w, b_lin, bias0))
    np.testing.assert_allclose(np.asarray(out0),
                               np.asarray(reference(z, w, b_lin, bias0)),
                               rtol=1e-5, atol=1e-5)

    # Nonzero (trained) bias -> exercises the SMEM-bias path.
    bias1 = jnp.asarray(0.25, jnp.float32)
    out1 = jax.block_until_ready(bilinear_contact_map(z, w, b_lin, bias1))
    np.testing.assert_allclose(np.asarray(out1),
                               np.asarray(reference(z, w, b_lin, bias1)),
                               rtol=1e-5, atol=1e-5)

    assert out0.shape == (B, L, L) and out1.shape == (B, L, L)
    print("KERNEL_OK")
</pallas_src>

<mosaic_0001>
module attributes {stable_mosaic.version = 11 : i64} {
  func.func @kernel(%arg0: i32, %arg1: i32, %arg2: i32, %arg3: memref<1x8x128xf32, #tpu.memory_space<vmem>>, %arg4: memref<1x8x128xf32, #tpu.memory_space<vmem>>, %arg5: memref<128x128xf32, #tpu.memory_space<vmem>>, %arg6: memref<1x128xf32, #tpu.memory_space<vmem>>, %arg7: memref<1x8x8xf32, #tpu.memory_space<vmem>>, %arg8: memref<8x128xf32, #tpu.memory_space<vmem>>) attributes {dimension_semantics = [#tpu.dimension_semantics<parallel>, #tpu.dimension_semantics<parallel>, #tpu.dimension_semantics<arbitrary>], iteration_bounds = array<i64: 2, 1, 1>, scalar_prefetch = 0 : i64, scratch_operands = 1 : i64, tpu.core_type = #tpu.core_type<tc>, window_params = [{transform_indices = @transform_0, window_bounds = array<i64: 1, 8, 128>}, {transform_indices = @transform_1, window_bounds = array<i64: 1, 8, 128>}, {pipeline_mode = #tpu.pipeline_mode<synchronous>, transform_indices = @transform_2, window_bounds = array<i64: 128, 128>}, {pipeline_mode = #tpu.pipeline_mode<synchronous>, transform_indices = @transform_3, window_bounds = array<i64: 1, 128>}, {transform_indices = @transform_4, window_bounds = array<i64: 1, 8, 8>}]} {
    %c0_i32 = arith.constant 0 : i32
    %0 = arith.cmpi eq, %arg2, %c0_i32 : i32
    %1 = arith.extui %0 : i1 to i32
    %c0_i32_0 = arith.constant 0 : i32
    %2 = arith.cmpi ne, %1, %c0_i32_0 : i32
    scf.if %2 {
      %c0_8 = arith.constant 0 : index
      %c0_9 = arith.constant 0 : index
      %c0_10 = arith.constant 0 : index
      %10 = vector.load %arg3[%c0_8, %c0_9, %c0_10] : memref<1x8x128xf32, #tpu.memory_space<vmem>>, vector<1x8x128xf32>
      %11 = vector.shape_cast %10 : vector<1x8x128xf32> to vector<8x128xf32>
      %c0_11 = arith.constant 0 : index
      %c0_12 = arith.constant 0 : index
      %12 = vector.load %arg5[%c0_11, %c0_12] : memref<128x128xf32, #tpu.memory_space<vmem>>, vector<128x128xf32>
      %cst_13 = arith.constant dense<0.000000e+00> : vector<8x128xf32>
      %13 = tpu.matmul %11, %12, %cst_13 {dimension_numbers = #tpu.dot_dimension_numbers<[1], [0], [0], [1], [0, 0, 1, 1], [], []>} : vector<8x128xf32>, vector<128x128xf32>, vector<8x128xf32> -> vector<8x128xf32>
      %c0_14 = arith.constant 0 : index
      %c0_15 = arith.constant 0 : index
      %14 = vector.load %arg6[%c0_14, %c0_15] : memref<1x128xf32, #tpu.memory_space<vmem>>, vector<1x128xf32>
      %15 = vector.broadcast %14 : vector<1x128xf32> to vector<8x128xf32>
      %16 = arith.addf %13, %15 : vector<8x128xf32>
      %c0_16 = arith.constant 0 : index
      %c0_17 = arith.constant 0 : index
      %17 = vector.load %arg8[%c0_16, %c0_17] : memref<8x128xf32, #tpu.memory_space<vmem>>, vector<8x128xf32>
      tpu.vector_store %arg8[%c0_16, %c0_17], %16 {strides = array<i32>} : memref<8x128xf32, #tpu.memory_space<vmem>>, vector<8x128xf32>,
    } else {
    }
    %c0 = arith.constant 0 : index
    %c0_1 = arith.constant 0 : index
    %3 = vector.load %arg8[%c0, %c0_1] : memref<8x128xf32, #tpu.memory_space<vmem>>, vector<8x128xf32>
    %c0_2 = arith.constant 0 : index
    %c0_3 = arith.constant 0 : index
    %c0_4 = arith.constant 0 : index
    %4 = vector.load %arg4[%c0_2, %c0_3, %c0_4] : memref<1x8x128xf32, #tpu.memory_space<vmem>>, vector<1x8x128xf32>
    %5 = vector.shape_cast %4 : vector<1x8x128xf32> to vector<8x128xf32>
    %cst = arith.constant dense<0.000000e+00> : vector<8x8xf32>
    %6 = tpu.matmul %3, %5, %cst {dimension_numbers = #tpu.dot_dimension_numbers<[1], [1], [0], [0], [0, 0, 1, 0], [], []>} : vector<8x128xf32>, vector<8x128xf32>, vector<8x8xf32> -> vector<8x8xf32>
    %c0_5 = arith.constant 0 : index
    %c0_6 = arith.constant 0 : index
    %c0_7 = arith.constant 0 : index
    %7 = vector.load %arg7[%c0_5, %c0_6, %c0_7] : memref<1x8x8xf32, #tpu.memory_space<vmem>>, vector<1x8x8xf32>
    %8 = vector.shape_cast %7 : vector<1x8x8xf32> to vector<8x8xf32>
    %9 = vector.shape_cast %6 : vector<8x8xf32> to vector<1x8x8xf32>
    tpu.vector_store %arg7[%c0_5, %c0_6, %c0_7], %9 {strides = array<i32>} : memref<1x8x8xf32, #tpu.memory_space<vmem>>, vector<1x8x8xf32>,
    return
  }
  func.func @transform_0(%arg0: i32, %arg1: i32, %arg2: i32) -> (i32, i32, i32) {
    %c0_i32 = arith.constant 0 : i32
    %c0_i32_0 = arith.constant 0 : i32
    return %arg0, %arg1, %c0_i32 : i32, i32, i32
  }
  func.func @transform_1(%arg0: i32, %arg1: i32, %arg2: i32) -> (i32, i32, i32) {
    %c0_i32 = arith.constant 0 : i32
    %c0_i32_0 = arith.constant 0 : i32
    return %arg0, %arg2, %c0_i32 : i32, i32, i32
  }
  func.func @transform_2(%arg0: i32, %arg1: i32, %arg2: i32) -> (i32, i32) {
    %c0_i32 = arith.constant 0 : i32
    %c0_i32_0 = arith.constant 0 : i32
    %c0_i32_1 = arith.constant 0 : i32
    return %c0_i32, %c0_i32_0 : i32, i32
  }
  func.func @transform_3(%arg0: i32, %arg1: i32, %arg2: i32) -> (i32, i32) {
    %c0_i32 = arith.constant 0 : i32
    %c0_i32_0 = arith.constant 0 : i32
    %c0_i32_1 = arith.constant 0 : i32
    return %c0_i32, %c0_i32_0 : i32, i32
  }
  func.func @transform_4(%arg0: i32, %arg1: i32, %arg2: i32) -> (i32, i32, i32) {
    %c0_i32 = arith.constant 0 : i32
    return %arg0, %arg1, %arg2 : i32, i32, i32
  }
}

</mosaic_0001>

<llo_original>
// kernel: tpu_custom_call.1
$region0: #{tpu_custom_call.1}
  #allocation0 [shape = 'u32[]', space=smem, size = 0x4, offset = 0x4, fixed_abs, tag = 'smem constant byte address 0x4 - core index']
  #allocation1 [shape = 'u32[144,128]{1,0:T(1,128)}', space=vmem, size = 0x12000, scoped, tag = 'internal scratch']
  #allocation2 [shape = 'f32[8,128]{1,0:T(8,128)}', space=vmem, size = 0x1000, scoped, tag = 'scratch operand']
  %s0 = inlined_call_operand.hbm [shape: f32[2,8,128], index: 0, kind: input, shape index: {}]
  %s1 = inlined_call_operand.hbm [shape: f32[2,8,128], index: 1, kind: input, shape index: {}]
  %s2 = inlined_call_operand.hbm [shape: f32[128,128], index: 2, kind: input, shape index: {}]
  %s3 = inlined_call_operand.vmem [shape: f32[1,128], index: 3, kind: input, shape index: {}]
  %s4 = inlined_call_operand.hbm [shape: f32[2,8,8], index: 4, kind: output, shape index: {}]
  %s5 = sld [smem:[#allocation0]]
  $region65: #{tpu_custom_call.1} parent=0
    _
  %s7 = ssub.s32 1, %s5
  %s8 = scalar_select 0, %s7, %s5
  $region1: #{tpu_custom_call.1} parent=0
    #allocation3 [shape = 'u8[8192]{0}', space=vmem, size = 0x2000, scoped, tag = 'input window, operand 0']
    #allocation4 [shape = 's32[2]{0}', space=sflag, size = 0x8, scoped, tag = 'scoped memory for tpu_custom_call.1']
    #allocation5 [shape = 's32[2]{0}', space=sflag, size = 0x8, scoped, tag = 'scoped memory for tpu_custom_call.1']
    #allocation6 [shape = 'u8[8192]{0}', space=vmem, size = 0x2000, scoped, tag = 'input window, operand 1']
    #allocation7 [shape = 's32[2]{0}', space=sflag, size = 0x8, scoped, tag = 'scoped memory for tpu_custom_call.1']
    #allocation8 [shape = 'u8[65536]{0}', space=vmem, size = 0x10000, scoped, tag = 'input window, operand 2, single buffered']
    #allocation9 [shape = 'u8[8192]{0}', space=vmem, size = 0x2000, scoped, tag = 'output window, operand 0']
    %9 = vsyncpa [#allocation4], 0
    %s10 = scalar_lea.sflag [#allocation4], 1
    %11 = vsyncpa %s10, 0
    %12 = vsyncpa [#allocation7], 0
    %s13 = scalar_lea.sflag [#allocation7], 1
    %14 = vsyncpa %s13, 0
    %15 = vsyncpa [#allocation5], 0
    %s16 = scalar_lea.sflag [#allocation5], 1
    %17 = vsyncpa %s16, 0
    loop: start=0, step=1, limit=4
    $region2: #{tpu_custom_call.1} parent=1 // loop_pre_header
      _
    $region3: #{tpu_custom_call.1} parent=1 // loop_header
      %s19 = sphi 0, %s23
      %p20 = scmp.ge.s32.totalorder %s19, 4
      %s26 = sphi 0, %s45
      %s27 = sphi 0, %s41
      %s28 = sphi 0, %s37
      %s29 = sphi 0, %s26
      %s30 = sphi 0, %s27
      %s31 = sphi 0, %s28
      %s32 = sphi 0, %s29
      %s33 = sphi 0, %s30
      %s34 = sphi 0, %s31
      %s50 = sphi 0, %s52
      %s53 = sphi 0, %s50
      %s54 = sphi 0, %s53
      %s70 = sphi 0, %s54
      %s78 = sphi 0, %s80
      %s81 = sphi 0, %s78
      %s82 = sphi 0, %s81
      %s98 = sphi 0, %s82
      %s102 = sphi 0, %s102
      %s104 = sphi 0, %s102
      %s105 = sphi 0, %s104
      %s119 = sphi 0, %s105
      %s123 = sphi 0, %s123
      %s125 = sphi 0, %s123
      %s126 = sphi 0, %s125
      %s140 = sphi 0, %s126
      %s150 = sphi 0, %s152
      %s153 = sphi 0, %s150
      %s154 = sphi 0, %s153
      %s170 = sphi 0, %s154
    $region4: #{tpu_custom_call.1} parent=1 // loop_header_branch
      %22 = sbr.rel (%p20) target = $region8
    $region5: #{tpu_custom_call.1} parent=1 // loop_body
      %s24 = ssub.s32 %s19, 1
      %s25 = ssub.s32 %s19, 2
      %s35 = sadd.s32 1, %s28
      %p36 = scmp.ge.s32.totalorder %s35, 1
      %s37 = scalar_select %p36, 0, %s35
      %s38 = sadd.s32 1, %s27
      %s39 = scalar_select %p36, %s38, %s27
      %p40 = scmp.ge.s32.totalorder %s39, 1
      %s41 = scalar_select %p40, 0, %s39
      %s42 = sadd.s32 1, %s26
      %s43 = scalar_select %p40, %s42, %s26
      %p44 = scmp.ge.s32.totalorder %s43, 2
      %s45 = scalar_select %p44, 0, %s43
      %s46 = ssub.s32 %s26, %s45
      %s47 = ssub.s32 %s27, %s41
      %s48 = sor.u32 %s46, %s47
      %p49 = scmp.eq.s32.totalorder %s48, 0
      %s51 = sadd.s32 %s50, 1
      %s52 = scalar_select %p49, %s50, %s51
      %p55 = pneg %p49
      %p56 = scmp.eq.s32.totalorder %s19, 1
      %p57 = por %p55, %p56
      %p58 = scmp.ne.s32.totalorder %s50, %s53
      %p59 = scmp.eq.s32.totalorder %s19, 0
      %p60 = por %p58, %p59
      %p61 = scmp.ne.s32.totalorder %s50, %s53
      %p62 = scmp.eq.s32.totalorder %s24, 1
      %p63 = por %p61, %p62
      %p64 = scmp.ne.s32.totalorder %s53, %s54
      %p65 = scmp.eq.s32.totalorder %s24, 0
      %p66 = por %p64, %p65
      %p67 = scmp.ne.s32.totalorder %s53, %s54
      %p68 = scmp.eq.s32.totalorder %s25, 1
      %p69 = por %p67, %p68
      %p71 = scmp.ne.s32.totalorder %s54, %s70
      %p72 = scmp.eq.s32.totalorder %s25, 0
      %p73 = por %p71, %p72
      %s74 = ssub.s32 %s26, %s45
      %s75 = ssub.s32 %s28, %s37
      %s76 = sor.u32 %s74, %s75
      %p77 = scmp.eq.s32.totalorder %s76, 0
      %s79 = sadd.s32 %s78, 1
      %s80 = scalar_select %p77, %s78, %s79
      %p83 = pneg %p77
      %p84 = scmp.eq.s32.totalorder %s19, 1
      %p85 = por %p83, %p84
      %p86 = scmp.ne.s32.totalorder %s78, %s81
      %p87 = scmp.eq.s32.totalorder %s19, 0
      %p88 = por %p86, %p87
      %p89 = scmp.ne.s32.totalorder %s78, %s81
      %p90 = scmp.eq.s32.totalorder %s24, 1
      %p91 = por %p89, %p90
      %p92 = scmp.ne.s32.totalorder %s81, %s82
      %p93 = scmp.eq.s32.totalorder %s24, 0
      %p94 = por %p92, %p93
      %p95 = scmp.ne.s32.totalorder %s81, %s82
      %p96 = scmp.eq.s32.totalorder %s25, 1
      %p97 = por %p95, %p96
      %p99 = scmp.ne.s32.totalorder %s82, %s98
      %p100 = scmp.eq.s32.totalorder %s25, 0
      %p101 = por %p99, %p100
      %s103 = sadd.s32 %s102, 1
      %p106 = scmp.eq.s32.totalorder %s19, 1
      %p107 = scmp.ne.s32.totalorder %s102, %s104
      %p108 = scmp.eq.s32.totalorder %s19, 0
      %p109 = por %p107, %p108
      %p110 = scmp.ne.s32.totalorder %s102, %s104
      %p111 = scmp.eq.s32.totalorder %s24, 1
      %p112 = por %p110, %p111
      %p113 = scmp.ne.s32.totalorder %s104, %s105
      %p114 = scmp.eq.s32.totalorder %s24, 0
      %p115 = por %p113, %p114
      %p116 = scmp.ne.s32.totalorder %s104, %s105
      %p117 = scmp.eq.s32.totalorder %s25, 1
      %p118 = por %p116, %p117
      %p120 = scmp.ne.s32.totalorder %s105, %s119
      %p121 = scmp.eq.s32.totalorder %s25, 0
      %p122 = por %p120, %p121
      %s124 = sadd.s32 %s123, 1
      %p127 = scmp.eq.s32.totalorder %s19, 1
      %p128 = scmp.ne.s32.totalorder %s123, %s125
      %p129 = scmp.eq.s32.totalorder %s19, 0
      %p130 = por %p128, %p129
      %p131 = scmp.ne.s32.totalorder %s123, %s125
      %p132 = scmp.eq.s32.totalorder %s24, 1
      %p133 = por %p131, %p132
      %p134 = scmp.ne.s32.totalorder %s125, %s126
      %p135 = scmp.eq.s32.totalorder %s24, 0
      %p136 = por %p134, %p135
      %p137 = scmp.ne.s32.totalorder %s125, %s126
      %p138 = scmp.eq.s32.totalorder %s25, 1
      %p139 = por %p137, %p138
      %p141 = scmp.ne.s32.totalorder %s126, %s140
      %p142 = scmp.eq.s32.totalorder %s25, 0
      %p143 = por %p141, %p142
      %s144 = ssub.s32 %s26, %s45
      %s145 = ssub.s32 %s27, %s41
      %s146 = sor.u32 %s144, %s145
      %s147 = ssub.s32 %s28, %s37
      %s148 = sor.u32 %s146, %s147
      %p149 = scmp.eq.s32.totalorder %s148, 0
      %s151 = sadd.s32 %s150, 1
      %s152 = scalar_select %p149, %s150, %s151
      %p155 = pneg %p149
      %p156 = scmp.eq.s32.totalorder %s19, 1
      %p157 = por %p155, %p156
      %p158 = scmp.ne.s32.totalorder %s150, %s153
      %p159 = scmp.eq.s32.totalorder %s19, 0
      %p160 = por %p158, %p159
      %p161 = scmp.ne.s32.totalorder %s150, %s153
      %p162 = scmp.eq.s32.totalorder %s24, 1
      %p163 = por %p161, %p162
      %p164 = scmp.ne.s32.totalorder %s153, %s154
      %p165 = scmp.eq.s32.totalorder %s24, 0
      %p166 = por %p164, %p165
      %p167 = scmp.ne.s32.totalorder %s153, %s154
      %p168 = scmp.eq.s32.totalorder %s25, 1
      %p169 = por %p167, %p168
      %p171 = scmp.ne.s32.totalorder %s154, %s170
      %p172 = scmp.eq.s32.totalorder %s25, 0
      %p173 = por %p171, %p172
      %p174 = scmp.le.s32.totalorder 1, %s19
      %p175 = scmp.lt.s32.totalorder %s19, 3
      %p176 = pnand %p174, %p175
      %p177 = pneg %p176
      // Predicated region
      $region9: #{tpu_custom_call.1} parent=5 // pred_check
        _
      $region10: #{tpu_custom_call.1} parent=5 // pred_check_branch
        %179 = sbr.rel (%p176) target = $region12
      $region11: #{tpu_custom_call.1} parent=5 // pred_region
        %s180 = ssub.s32 %s19, 1
        // Predicated region
        $region13: #{tpu_custom_call.1} parent=11 // pred_check
          %p181 = pneg %p115
        $region14: #{tpu_custom_call.1} parent=11 // pred_check_branch
          %183 = sbr.rel (%p181) target = $region16
        $region15: #{tpu_custom_call.1} parent=11 // pred_region
          %s185 = ssub.s32 2048, 2048
          %186 = vsyncadd [#allocation7], %s185
          %s187 = sshll.u32 [#allocation8], 4
          %s188 = int_to_ptr.vmem [resolvable:$true] %s187
          %193 = dma.hbm_to_vmem [thread:$0]  %s2, 2048, %s188, [#allocation7], 128, 128, 8
        $region16: #{tpu_custom_call.1} parent=11 // pred_fallthru
          _
        // Predicated region
        $region17: #{tpu_custom_call.1} parent=11 // pred_check
          %p194 = pneg %p136
        $region18: #{tpu_custom_call.1} parent=11 // pred_check_branch
          %196 = sbr.rel (%p194) target = $region20
        $region19: #{tpu_custom_call.1} parent=11 // pred_region
          _
        $region20: #{tpu_custom_call.1} parent=11 // pred_fallthru
          _
      $region12: #{tpu_custom_call.1} parent=5 // pred_fallthru
        _
      %p197 = scmp.lt.s32.totalorder %s19, 2
      // Predicated region
      $region21: #{tpu_custom_call.1} parent=5 // pred_check
        %p198 = pneg %p197
      $region22: #{tpu_custom_call.1} parent=5 // pred_check_branch
        %200 = sbr.rel (%p198) target = $region24
      $region23: #{tpu_custom_call.1} parent=5 // pred_region
        // Predicated region
        $region25: #{tpu_custom_call.1} parent=23 // pred_check
          %p201 = pneg %p60
        $region26: #{tpu_custom_call.1} parent=23 // pred_check_branch
          %203 = sbr.rel (%p201) target = $region28
        $region27: #{tpu_custom_call.1} parent=23 // pred_region
          %s204 = sand.u32 %s50, 1
          %s205 = scalar_lea.sflag [#allocation4], %s204
          %s206 = sand.u32 %s50, 1
          %s207 = smul.addr %s206, 8
          %s208 = scalar_lea.vmem [#allocation3], %s207
          %s210 = ssub.s32 128, 128
          %211 = vsyncadd %s205, %s210
          %s212 = sadd.s32 %s27, %s26
          %s213 = smul.addr %s212, 128
          %s214 = scalar_lea.hbm %s0, %s213
          %s216 = sshll.u32 %s208, 4
          %s217 = int_to_ptr.vmem [resolvable:$true] %s216
          %219 = dma.hbm_to_vmem [thread:$0]  %s214, 128, %s217, %s205
        $region28: #{tpu_custom_call.1} parent=23 // pred_fallthru
          _
        // Predicated region
        $region29: #{tpu_custom_call.1} parent=23 // pred_check
          %p220 = pneg %p88
        $region30: #{tpu_custom_call.1} parent=23 // pred_check_branch
          %222 = sbr.rel (%p220) target = $region32
        $region31: #{tpu_custom_call.1} parent=23 // pred_region
          %s223 = sand.u32 %s19, 1
          %s224 = scalar_lea.sflag [#allocation7], %s223
          %s225 = sand.u32 %s78, 1
          %s226 = smul.addr %s225, 8
          %s227 = scalar_lea.vmem [#allocation6], %s226
          %s229 = ssub.s32 128, 128
          %230 = vsyncadd %s224, %s229
          %s231 = sadd.s32 %s28, %s26
          %s232 = smul.addr %s231, 128
          %s233 = scalar_lea.hbm %s1, %s232
          %s235 = sshll.u32 %s227, 4
          %s236 = int_to_ptr.vmem [resolvable:$true] %s235
          %238 = dma.hbm_to_vmem [thread:$0]  %s233, 128, %s236, %s224
        $region32: #{tpu_custom_call.1} parent=23 // pred_fallthru
          _
      $region24: #{tpu_custom_call.1} parent=5 // pred_fallthru
        _
      %p239 = scmp.le.s32.totalorder 1, %s19
      %p240 = scmp.lt.s32.totalorder %s19, 3
      %p241 = pnand %p239, %p240
      %p242 = pneg %p241
      // Predicated region
      $region33: #{tpu_custom_call.1} parent=5 // pred_check
        _
      $region34: #{tpu_custom_call.1} parent=5 // pred_check_branch
        %244 = sbr.rel (%p241) target = $region36
      $region35: #{tpu_custom_call.1} parent=5 // pred_region
        %s245 = ssub.s32 %s19, 1
        %s246 = sand.u32 %s53, 1
        %s247 = scalar_lea.sflag [#allocation4], %s246
        %s248 = sand.u32 %s53, 1
        %s249 = smul.addr %s248, 8
        %s250 = scalar_lea.vmem [#allocation3], %s249
        // Predicated region
        $region37: #{tpu_custom_call.1} parent=35 // pred_check
          %p251 = pneg %p66
        $region38: #{tpu_custom_call.1} parent=35 // pred_check_branch
          %253 = sbr.rel (%p251) target = $region40
        $region39: #{tpu_custom_call.1} parent=35 // pred_region
          %254 = dma.done %s247, 128
        $region40: #{tpu_custom_call.1} parent=35 // pred_fallthru
          _
        %s255 = sand.u32 %s24, 1
        %s256 = scalar_lea.sflag [#allocation7], %s255
        %s257 = sand.u32 %s81, 1
        %s258 = smul.addr %s257, 8
        %s259 = scalar_lea.vmem [#allocation6], %s258
        // Predicated region
        $region41: #{tpu_custom_call.1} parent=35 // pred_check
          %p260 = pneg %p94
        $region42: #{tpu_custom_call.1} parent=35 // pred_check_branch
          %262 = sbr.rel (%p260) target = $region44
        $region43: #{tpu_custom_call.1} parent=35 // pred_region
          %263 = dma.done %s256, 128
        $region44: #{tpu_custom_call.1} parent=35 // pred_fallthru
          _
        // Predicated region
        $region45: #{tpu_custom_call.1} parent=35 // pred_check
          %p264 = pneg %p115
        $region46: #{tpu_custom_call.1} parent=35 // pred_check_branch
          %266 = sbr.rel (%p264) target = $region48
        $region47: #{tpu_custom_call.1} parent=35 // pred_region
          %267 = dma.done [#allocation7], 2048
        $region48: #{tpu_custom_call.1} parent=35 // pred_fallthru
          _
        %s268 = sand.u32 %s53, 1
        %s269 = scalar_lea.sflag [#allocation4], %s268
        %s270 = sand.u32 %s53, 1
        %s271 = smul.addr %s270, 8
        %s272 = scalar_lea.vmem [#allocation3], %s271
        %p273 = pneg %p66
        %p274 = pneg %p63
        %s275 = sand.u32 %s24, 1
        %s276 = scalar_lea.sflag [#allocation7], %s275
        %s277 = sand.u32 %s81, 1
        %s278 = smul.addr %s277, 8
        %s279 = scalar_lea.vmem [#allocation6], %s278
        %p280 = pneg %p94
        %p281 = pneg %p91
        %p282 = pneg %p115
        %p283 = pneg %p112
        %p284 = pneg %p136
        %p285 = pneg %p133
        %p286 = pneg %p166
        %p287 = pneg %p163
        %s288 = sand.u32 %s153, 1
        %s289 = scalar_lea.sflag [#allocation5], %s288
        %s290 = sand.u32 %s153, 1
        %s291 = smul.addr %s290, 8
        %s292 = scalar_lea.vmem [#allocation9], %s291
        %p293 = scmp.eq.s32.totalorder %s31, 0
        // Predicated region
        $region49: #{tpu_custom_call.1} parent=35 // pred_check
          %p294 = pneg %p293
        $region50: #{tpu_custom_call.1} parent=35 // pred_check_branch
          %296 = sbr.rel (%p294) target = $region52
        $region51: #{tpu_custom_call.1} parent=35 // pred_region
          %v297 = vld [vmem:[%s250] sm:$0xff]
          %v298 = vld [vmem:[#allocation8] sm:$0xff]
          %v299 = vld [vmem:[#allocation8 + $0x8] sm:$0xff]
          %v300 = vld [vmem:[#allocation8 + $0x10] sm:$0xff]
          %v301 = vld [vmem:[#allocation8 + $0x18] sm:$0xff]
          %v302 = vld [vmem:[#allocation8 + $0x20] sm:$0xff]
          %v303 = vld [vmem:[#allocation8 + $0x28] sm:$0xff]
          %v304 = vld [vmem:[#allocation8 + $0x30] sm:$0xff]
          %v305 = vld [vmem:[#allocation8 + $0x38] sm:$0xff]
          %v306 = vld [vmem:[#allocation8 + $0x40] sm:$0xff]
          %v307 = vld [vmem:[#allocation8 + $0x48] sm:$0xff]
          %v308 = vld [vmem:[#allocation8 + $0x50] sm:$0xff]
          %v309 = vld [vmem:[#allocation8 + $0x58] sm:$0xff]
          %v310 = vld [vmem:[#allocation8 + $0x60] sm:$0xff]
          %v311 = vld [vmem:[#allocation8 + $0x68] sm:$0xff]
          %v312 = vld [vmem:[#allocation8 + $0x70] sm:$0xff]
          %v313 = vld [vmem:[#allocation8 + $0x78] sm:$0xff]
          %v314 = vld [vmem:[%s3] sm:$0x1]
          %v316 = vlaneseq
          %v317 = vshrl.u32 %v316, 7
          %v318 = vsub.s32 0, %v317
          %v319 = vrot.slane %v314, %v318
          %321 = vmatprep.subr.mxu0 0.0
          %322 = vmatpush1.msra.mxu0 %v313
          %323 = vmatprep.subr.mxu0 0.0
          %324 = vmatpush1.msra.mxu0 %v312
          %325 = vmatprep.subr.mxu0 0.0
          %326 = vmatpush1.msra.mxu0 %v311
          %327 = vmatprep.subr.mxu0 0.0
          %328 = vmatpush1.msra.mxu0 %v310
          %329 = vmatprep.subr.mxu0 0.0
          %330 = vmatpush1.msra.mxu0 %v309
          %331 = vmatprep.subr.mxu0 0.0
          %332 = vmatpush1.msra.mxu0 %v308
          %333 = vmatprep.subr.mxu0 0.0
          %334 = vmatpush1.msra.mxu0 %v307
          %335 = vmatprep.subr.mxu0 0.0
          %336 = vmatpush1.msra.mxu0 %v306
          %337 = vmatprep.subr.mxu0 0.0
          %338 = vmatpush1.msra.mxu0 %v305
          %339 = vmatprep.subr.mxu0 0.0
          %340 = vmatpush1.msra.mxu0 %v304
          %341 = vmatprep.subr.mxu0 0.0
          %342 = vmatpush1.msra.mxu0 %v303
          %343 = vmatprep.subr.mxu0 0.0
          %344 = vmatpush1.msra.mxu0 %v302
          %345 = vmatprep.subr.mxu0 0.0
          %346 = vmatpush1.msra.mxu0 %v301
          %347 = vmatprep.subr.mxu0 0.0
          %348 = vmatpush1.msra.mxu0 %v300
          %349 = vmatprep.subr.mxu0 0.0
          %350 = vmatpush1.msra.mxu0 %v299
          %351 = vmatprep.subr.mxu0 0.0
          %352 = vmatpush1.msra.mxu0 %v298
          %353 = vmatprep.subr.mxu0 0.0
          %354 = vmatpush2.msra.mxu0 0.0
          %355 = vmatprep.subr.mxu0 0.0
          %356 = vmatpush2.msra.mxu0 0.0
          %357 = vmatprep.subr.mxu0 0.0
          %358 = vmatpush2.msra.mxu0 0.0
          %359 = vmatprep.subr.mxu0 0.0
          %360 = vmatpush2.msra.mxu0 0.0
          %361 = vmatprep.subr.mxu0 0.0
          %362 = vmatpush2.msra.mxu0 0.0
          %363 = vmatprep.subr.mxu0 0.0
          %364 = vmatpush2.msra.mxu0 0.0
          %365 = vmatprep.subr.mxu0 0.0
          %366 = vmatpush2.msra.mxu0 0.0
          %367 = vmatprep.subr.mxu0 0.0
          %368 = vmatpush2.msra.mxu0 0.0
          %369 = vmatprep.subr.mxu0 0.0
          %370 = vmatpush2.msra.mxu0 0.0
          %371 = vmatprep.subr.mxu0 0.0
          %372 = vmatpush2.msra.mxu0 0.0
          %373 = vmatprep.subr.mxu0 0.0
          %374 = vmatpush2.msra.mxu0 0.0
          %375 = vmatprep.subr.mxu0 0.0
          %376 = vmatpush2.msra.mxu0 0.0
          %377 = vmatprep.subr.mxu0 0.0
          %378 = vmatpush2.msra.mxu0 0.0
          %379 = vmatprep.subr.mxu0 0.0
          %380 = vmatpush2.msra.mxu0 0.0
          %381 = vmatprep.subr.mxu0 0.0
          %382 = vmatpush2.msra.mxu0 0.0
          %383 = vmatprep.subr.mxu0 0.0
          %384 = vmatpush2.msra.mxu0 0.0
          %385 = vmatprep.mubr.f32.mxu0 0.0
          %386 = vmatmul.mubr.f32.gmra.mxu0 %v297
          %v387 = vpop.f32.mrf.mxu0
          %v388 = vadd.f32 %v319, %v387
          %v389 = vpop.f32.mrf.mxu0
          %390 = vdwg.mxu0
          %391 = vst [vmem:[#allocation2] sm:$0xff] %v388
        $region52: #{tpu_custom_call.1} parent=35 // pred_fallthru
          _
        %v392 = vld [vmem:[#allocation2] sm:$0xff]
        %v393 = vld [vmem:[%s259] sm:$0xff]
        %394 = vmatprep.subr.mxu0 0.0
        %395 = vmatpush1.xpose.msra.mxu0 0.0
        %396 = vmatprep.subr.mxu0 0.0
        %397 = vmatpush1.xpose.msra.mxu0 0.0
        %398 = vmatprep.subr.mxu0 0.0
        %399 = vmatpush1.xpose.msra.mxu0 0.0
        %400 = vmatprep.subr.mxu0 0.0
        %401 = vmatpush1.xpose.msra.mxu0 0.0
        %402 = vmatprep.subr.mxu0 0.0
        %403 = vmatpush1.xpose.msra.mxu0 0.0
        %404 = vmatprep.subr.mxu0 0.0
        %405 = vmatpush1.xpose.msra.mxu0 0.0
        %406 = vmatprep.subr.mxu0 0.0
        %407 = vmatpush1.xpose.msra.mxu0 0.0
        %408 = vmatprep.subr.mxu0 0.0
        %409 = vmatpush1.xpose.msra.mxu0 0.0
        %410 = vmatprep.subr.mxu0 0.0
        %411 = vmatpush1.xpose.msra.mxu0 0.0
        %412 = vmatprep.subr.mxu0 0.0
        %413 = vmatpush1.xpose.msra.mxu0 0.0
        %414 = vmatprep.subr.mxu0 0.0
        %415 = vmatpush1.xpose.msra.mxu0 0.0
        %416 = vmatprep.subr.mxu0 0.0
        %417 = vmatpush1.xpose.msra.mxu0 0.0
        %418 = vmatprep.subr.mxu0 0.0
        %419 = vmatpush1.xpose.msra.mxu0 0.0
        %420 = vmatprep.subr.mxu0 0.0
        %421 = vmatpush1.xpose.msra.mxu0 0.0
        %422 = vmatprep.subr.mxu0 0.0
        %423 = vmatpush1.xpose.msra.mxu0 0.0
        %424 = vmatprep.subr.mxu0 0.0
        %425 = vmatpush1.xpose.msra.mxu0 %v393
        %426 = vmatprep.subr.mxu0 0.0
        %427 = vmatpush2.xpose.msra.mxu0 0.0
        %428 = vmatprep.subr.mxu0 0.0
        %429 = vmatpush2.xpose.msra.mxu0 0.0
        %430 = vmatprep.subr.mxu0 0.0
        %431 = vmatpush2.xpose.msra.mxu0 0.0
        %432 = vmatprep.subr.mxu0 0.0
        %433 = vmatpush2.xpose.msra.mxu0 0.0
        %434 = vmatprep.subr.mxu0 0.0
        %435 = vmatpush2.xpose.msra.mxu0 0.0
        %436 = vmatprep.subr.mxu0 0.0
        %437 = vmatpush2.xpose.msra.mxu0 0.0
        %438 = vmatprep.subr.mxu0 0.0
        %439 = vmatpush2.xpose.msra.mxu0 0.0
        %440 = vmatprep.subr.mxu0 0.0
        %441 = vmatpush2.xpose.msra.mxu0 0.0
        %442 = vmatprep.subr.mxu0 0.0
        %443 = vmatpush2.xpose.msra.mxu0 0.0
        %444 = vmatprep.subr.mxu0 0.0
        %445 = vmatpush2.xpose.msra.mxu0 0.0
        %446 = vmatprep.subr.mxu0 0.0
        %447 = vmatpush2.xpose.msra.mxu0 0.0
        %448 = vmatprep.subr.mxu0 0.0
        %449 = vmatpush2.xpose.msra.mxu0 0.0
        %450 = vmatprep.subr.mxu0 0.0
        %451 = vmatpush2.xpose.msra.mxu0 0.0
        %452 = vmatprep.subr.mxu0 0.0
        %453 = vmatpush2.xpose.msra.mxu0 0.0
        %454 = vmatprep.subr.mxu0 0.0
        %455 = vmatpush2.xpose.msra.mxu0 0.0
        %456 = vmatprep.subr.mxu0 0.0
        %457 = vmatpush2.xpose.msra.mxu0 0.0
        %458 = vmatprep.mubr.f32.mxu0 0.0
        %459 = vmatmul.mubr.f32.gmra.mxu0 %v392
        %v460 = vpop.f32.mrf.mxu0
        %v461 = vadd.f32 0.0, %v460
        %v462 = vpop.f32.mrf.mxu0
        %463 = vdwg.mxu0
        %vm464 = vcmask 64512
        %465 = vst.msk [vmem:[%s292] sm:$0xff] %vm464, %v461
        %s466 = sand.u32 %s153, 1
        %s467 = scalar_lea.sflag [#allocation5], %s466
        %s468 = sand.u32 %s153, 1
        %s469 = smul.addr %s468, 8
        %s470 = scalar_lea.vmem [#allocation9], %s469
        // Predicated region
        $region53: #{tpu_custom_call.1} parent=35 // pred_check
          %p471 = pneg %p163
        $region54: #{tpu_custom_call.1} parent=35 // pred_check_branch
          %473 = sbr.rel (%p471) target = $region56
        $region55: #{tpu_custom_call.1} parent=35 // pred_region
          %s475 = ssub.s32 128, 128
          %476 = vsyncadd %s467, %s475
          %s477 = sadd.s32 %s31, %s30
          %s478 = sadd.s32 %s477, %s29
          %s479 = smul.addr %s478, 128
          %s480 = scalar_lea.hbm %s4, %s479
          %s482 = sshll.u32 %s470, 4
          %s483 = int_to_ptr.vmem [resolvable:$true] %s482
          %485 = dma.vmem_to_hbm [thread:$0]  %s483, 128, %s480, %s467
        $region56: #{tpu_custom_call.1} parent=35 // pred_fallthru
          _
      $region36: #{tpu_custom_call.1} parent=5 // pred_fallthru
        _
      %p486 = scmp.le.s32.totalorder 2, %s19
      // Predicated region
      $region57: #{tpu_custom_call.1} parent=5 // pred_check
        %p487 = pneg %p486
      $region58: #{tpu_custom_call.1} parent=5 // pred_check_branch
        %489 = sbr.rel (%p487) target = $region60
      $region59: #{tpu_custom_call.1} parent=5 // pred_region
        %s490 = ssub.s32 %s19, 2
        // Predicated region
        $region61: #{tpu_custom_call.1} parent=59 // pred_check
          %p491 = pneg %p169
        $region62: #{tpu_custom_call.1} parent=59 // pred_check_branch
          %493 = sbr.rel (%p491) target = $region64
        $region63: #{tpu_custom_call.1} parent=59 // pred_region
          %s494 = sand.u32 %s154, 1
          %s495 = scalar_lea.sflag [#allocation5], %s494
          %s496 = sand.u32 %s154, 1
          %s497 = smul.addr %s496, 8
          %s498 = scalar_lea.vmem [#allocation9], %s497
          %499 = dma.done %s495, 128
        $region64: #{tpu_custom_call.1} parent=59 // pred_fallthru
          _
      $region60: #{tpu_custom_call.1} parent=5 // pred_fallthru
        _
    $region6: #{tpu_custom_call.1} parent=1 // loop_footer
      %s23 = sadd.s32 1, %s19
    $region7: #{tpu_custom_call.1} parent=1 // loop_footer_branch
      %18 = sbr.rel target = $region3
    $region8: #{tpu_custom_call.1} parent=1 // loop_exit
      _
    %500 = vsyncpa [#allocation4], 1
    %s501 = scalar_lea.sflag [#allocation4], 1
    %502 = vsyncpa %s501, 1
    %503 = vsyncpa [#allocation7], 1
    %s504 = scalar_lea.sflag [#allocation7], 1
    %505 = vsyncpa %s504, 1
    %506 = vsyncpa [#allocation5], 1
    %s507 = scalar_lea.sflag [#allocation5], 1
    %508 = vsyncpa %s507, 1

</llo_original>
